<compile_context>
chip_gen: v6e
topology: v6e:2x2x1
jax: 0.10.0
libtpu: 0.0.40
codegen_flags: <defaults>
</compile_context>

<pallas_src>
import functools

import jax
import jax.numpy as jnp
from jax.experimental import pallas as pl
from jax.experimental.pallas import tpu as pltpu

# ----------------------------- model config ---------------------------------
INPUT_DIM = 16
HIDDEN_DIM = 32
OUTPUT_DIM = 2
N_HEADS = 4
FEATURE_LAYERS = 2          # feature_processor depth (>= 1)
OUT_PAD = 8                 # classifier width padded to 8 (full-array last dim)

BATCH = 16                  # small test batch; kernel scales to large batches
DEFAULT_BATCH_TILE = 1024   # rows per grid step for large batches
                            # (multiple of 128 for v5e MXU, 256 for v6e/v7x)


# ------------------------------- kernel -------------------------------------
def _jamba_kernel(num_rest_layers, x_ref, wfe_ref, bfe_ref, wfu_ref, bfu_ref,
                  *rest_refs):
    if num_rest_layers > 0:
        wfp_ref, bfp_ref, wcl_ref, bcl_ref, out_ref = rest_refs
    else:
        wcl_ref, bcl_ref, out_ref = rest_refs

    f32 = jnp.float32
    x = x_ref[...]

    # feature_extractor: Linear -> ReLU -> Dropout (identity in eval mode)
    # TODO(synk): training-mode stochastic dropout not implemented (eval identity).
    feat = jnp.dot(x, wfe_ref[...], preferred_element_type=f32) + bfe_ref[...]
    feat = jnp.maximum(feat, 0.0)

    # Fused affine chain: MHA v-proj -> MHA out-proj -> feature_processor[0]
    # (softmax over a single key == 1.0, so q/k projections cancel exactly;
    # the three affines are folded into one matmul at parameter-prep time).
    feat = jnp.dot(feat, wfu_ref[...], preferred_element_type=f32) + bfu_ref[...]
    feat = jnp.maximum(feat, 0.0)

    # Remaining feature_processor layers: Linear -> ReLU -> Dropout[identity]
    for layer in range(num_rest_layers):        # static unroll, tiny count
        feat = jnp.dot(feat, wfp_ref[layer], preferred_element_type=f32) + bfp_ref[layer]
        feat = jnp.maximum(feat, 0.0)

    # classifier (output padded to 8 lanes; real columns sliced outside)
    out_ref[...] = jnp.dot(feat, wcl_ref[...], preferred_element_type=f32) + bcl_ref[...]


# ------------------------- one-time parameter prep ---------------------------
def prepare_params(params):
    """Constant folding / padding done ONCE, off the forward path."""
    hp = jax.lax.Precision.HIGHEST

    # Fold the three consecutive affines (no nonlinearity between them):
    #   MHA v-proj -> MHA out-proj -> feature_processor[0] (pre-ReLU).
    wv, bv = params["wv"], params["bv"]
    wo, bo = params["wo"], params["bo"]
    wfp, bfp = params["wfp"], params["bfp"]
    w_fused = jnp.dot(jnp.dot(wv, wo, precision=hp), wfp[0], precision=hp)
    b_fused = jnp.dot(jnp.dot(bv, wo, precision=hp) + bo, wfp[0], precision=hp) + bfp[0]

    num_rest = FEATURE_LAYERS - 1
    prep = {
        "wfe": params["wfe"], "bfe": params["bfe"],
        "wfu": w_fused, "bfu": b_fused,
        "num_rest": num_rest,
    }
    if num_rest > 0:
        prep["wfp_rest"] = wfp[1:]            # (L-1, H, H)
        prep["bfp_rest"] = bfp[1:]            # (L-1, 1, H)

    # Classifier padded to OUT_PAD output columns (tiny, prepped once).
    wcl_pad = jnp.zeros((HIDDEN_DIM, OUT_PAD), jnp.float32).at[:, :OUTPUT_DIM].set(params["wcl"])
    bcl_pad = jnp.zeros((1, OUT_PAD), jnp.float32).at[:, :OUTPUT_DIM].set(params["bcl"])
    prep["wcl"] = wcl_pad
    prep["bcl"] = bcl_pad
    return jax.tree_util.tree_map(
        lambda a: jax.device_put(a) if isinstance(a, jnp.ndarray) else a, prep)


# ------------------------------ wrapper --------------------------------------
def jamba_forward(x, prep, *, batch_tile=DEFAULT_BATCH_TILE):
    b = x.shape[0]
    num_rest = prep["num_rest"]

    # Clamp the tile for small batches (single grid step, no wasted rows);
    # keep it sublane-aligned (multiple of 8).
    b_aligned = ((b + 7) // 8) * 8
    tile = min(batch_tile, b_aligned)
    n_tiles = pl.cdiv(b, tile)
    bp = n_tiles * tile
    # Only pad x when the batch is not tile-divisible (extra HBM pass otherwise).
    xp = x if bp == b else jnp.pad(x, ((0, bp - b), (0, 0)))

    def full(arr):
        shape = arr.shape
        return pl.BlockSpec(shape, lambda i, _n=len(shape): (0,) * _n)

    in_specs = [
        pl.BlockSpec((tile, INPUT_DIM), lambda i: (i, 0)),   # x
        full(prep["wfe"]), full(prep["bfe"]),                # feature_extractor
        full(prep["wfu"]), full(prep["bfu"]),                # fused affine chain
    ]
    args = [xp, prep["wfe"], prep["bfe"], prep["wfu"], prep["bfu"]]
    if num_rest > 0:
        in_specs += [full(prep["wfp_rest"]), full(prep["bfp_rest"])]
        args += [prep["wfp_rest"], prep["bfp_rest"]]
    in_specs += [full(prep["wcl"]), full(prep["bcl"])]
    args += [prep["wcl"], prep["bcl"]]

    # Advisory cost estimate (model is ~0 FLOPs; helps XLA place the call).
    weight_bytes = sum(int(a.size) * a.dtype.itemsize for a in args[1:])
    flops = 2 * bp * (INPUT_DIM * HIDDEN_DIM
                      + HIDDEN_DIM * HIDDEN_DIM * (1 + num_rest)
                      + HIDDEN_DIM * OUT_PAD)
    bytes_accessed = int(xp.size) * 4 + bp * OUT_PAD * 4 + weight_bytes

    kernel = functools.partial(_jamba_kernel, num_rest)
    out = pl.pallas_call(
        kernel,
        out_shape=jax.ShapeDtypeStruct((bp, OUT_PAD), jnp.float32),
        grid=(n_tiles,),
        in_specs=in_specs,
        out_specs=pl.BlockSpec((tile, OUT_PAD), lambda i: (i, 0)),
        compiler_params=pltpu.CompilerParams(
            dimension_semantics=("parallel",)),
        cost_estimate=pl.CostEstimate(
            flops=flops, transcendentals=0, bytes_accessed=bytes_accessed),
    )(*args)

    return out[:b, :OUTPUT_DIM]


# ---------------------- deterministic parameter init -------------------------
def init_params(key):
    ks = jax.random.split(key, 16)

    def linear(kw, kb, fan_in, fan_out):
        bound = 1.0 / jnp.sqrt(fan_in)
        w = jax.random.uniform(kw, (fan_in, fan_out), jnp.float32, -bound, bound)
        b = jax.random.uniform(kb, (1, fan_out), jnp.float32, -bound, bound)
        return w, b

    p = {}
    p["wfe"], p["bfe"] = linear(ks[0], ks[1], INPUT_DIM, HIDDEN_DIM)
    # MHA in_proj (q, k, v) + out_proj — q/k only needed by the reference.
    p["wq"], p["bq"] = linear(ks[2], ks[3], HIDDEN_DIM, HIDDEN_DIM)
    p["wk"], p["bk"] = linear(ks[4], ks[5], HIDDEN_DIM, HIDDEN_DIM)
    p["wv"], p["bv"] = linear(ks[6], ks[7], HIDDEN_DIM, HIDDEN_DIM)
    p["wo"], p["bo"] = linear(ks[8], ks[9], HIDDEN_DIM, HIDDEN_DIM)
    # feature_processor stacked: (L, H, H) weights, (L, 1, H) biases
    wfp, bfp = [], []
    for l in range(FEATURE_LAYERS):
        w, b = linear(jax.random.fold_in(ks[10], l),
                      jax.random.fold_in(ks[11], l),
                      HIDDEN_DIM, HIDDEN_DIM)
        wfp.append(w)
        bfp.append(b)
    p["wfp"] = jnp.stack(wfp, axis=0)
    p["bfp"] = jnp.stack(bfp, axis=0)
    p["wcl"], p["bcl"] = linear(ks[12], ks[13], HIDDEN_DIM, OUTPUT_DIM)
    return p


# --------------------------- pure-JAX reference -------------------------------
def reference_forward(x, p):
    """Unfused reference with the full per-head q/k/softmax math."""
    hp = jax.lax.Precision.HIGHEST
    feat = jax.nn.relu(jnp.dot(x, p["wfe"], precision=hp) + p["bfe"])

    # full MultiheadAttention math, batch_first=True, seq_len == 1
    b = feat.shape[0]
    dh = HIDDEN_DIM // N_HEADS
    q = (jnp.dot(feat, p["wq"], precision=hp) + p["bq"]).reshape(b, N_HEADS, dh)
    k = (jnp.dot(feat, p["wk"], precision=hp) + p["bk"]).reshape(b, N_HEADS, dh)
    v = (jnp.dot(feat, p["wv"], precision=hp) + p["bv"]).reshape(b, N_HEADS, dh)
    scores = jnp.sum(q * k, axis=-1, keepdims=True) / jnp.sqrt(float(dh))  # (b, nh, 1)
    weights = jax.nn.softmax(scores, axis=-1)       # softmax over one key == 1.0
    attended = (weights * v).reshape(b, HIDDEN_DIM)
    feat = jnp.dot(attended, p["wo"], precision=hp) + p["bo"]

    for l in range(FEATURE_LAYERS):
        feat = jax.nn.relu(jnp.dot(feat, p["wfp"][l], precision=hp) + p["bfp"][l])

    return jnp.dot(feat, p["wcl"], precision=hp) + p["bcl"]


# --------------------------------- main ---------------------------------------
if __name__ == "__main__":
    key = jax.random.PRNGKey(0)
    k_x, k_p = jax.random.split(key)
    x = jax.random.normal(k_x, (BATCH, INPUT_DIM), dtype=jnp.float32)
    params = init_params(k_p)

    prep = prepare_params(params)           # one-time constant folding/padding

    out = jax.block_until_ready(jamba_forward(x, prep))
    ref = jax.block_until_ready(reference_forward(x, params))

    assert out.shape == (BATCH, OUTPUT_DIM), out.shape
    assert jnp.allclose(out, ref, rtol=1e-4, atol=1e-4), (out, ref)

    print("KERNEL_OK")
</pallas_src>

<mosaic_0001>
module attributes {stable_mosaic.version = 11 : i64} {
  func.func @_jamba_kernel(%arg0: i32, %arg1: memref<16x16xf32, #tpu.memory_space<vmem>>, %arg2: memref<16x32xf32, #tpu.memory_space<vmem>>, %arg3: memref<1x32xf32, #tpu.memory_space<vmem>>, %arg4: memref<32x32xf32, #tpu.memory_space<vmem>>, %arg5: memref<1x32xf32, #tpu.memory_space<vmem>>, %arg6: memref<1x32x32xf32, #tpu.memory_space<vmem>>, %arg7: memref<1x1x32xf32, #tpu.memory_space<vmem>>, %arg8: memref<32x8xf32, #tpu.memory_space<vmem>>, %arg9: memref<1x8xf32, #tpu.memory_space<vmem>>, %arg10: memref<16x8xf32, #tpu.memory_space<vmem>>) attributes {dimension_semantics = [#tpu.dimension_semantics<parallel>], iteration_bounds = array<i64: 1>, scalar_prefetch = 0 : i64, scratch_operands = 0 : i64, tpu.core_type = #tpu.core_type<tc>, window_params = [{transform_indices = @transform_0, window_bounds = array<i64: 16, 16>}, {pipeline_mode = #tpu.pipeline_mode<synchronous>, transform_indices = @transform_1, window_bounds = array<i64: 16, 32>}, {pipeline_mode = #tpu.pipeline_mode<synchronous>, transform_indices = @transform_2, window_bounds = array<i64: 1, 32>}, {pipeline_mode = #tpu.pipeline_mode<synchronous>, transform_indices = @transform_3, window_bounds = array<i64: 32, 32>}, {pipeline_mode = #tpu.pipeline_mode<synchronous>, transform_indices = @transform_4, window_bounds = array<i64: 1, 32>}, {pipeline_mode = #tpu.pipeline_mode<synchronous>, transform_indices = @transform_5, window_bounds = array<i64: 1, 32, 32>}, {pipeline_mode = #tpu.pipeline_mode<synchronous>, transform_indices = @transform_6, window_bounds = array<i64: 1, 1, 32>}, {pipeline_mode = #tpu.pipeline_mode<synchronous>, transform_indices = @transform_7, window_bounds = array<i64: 32, 8>}, {pipeline_mode = #tpu.pipeline_mode<synchronous>, transform_indices = @transform_8, window_bounds = array<i64: 1, 8>}, {transform_indices = @transform_9, window_bounds = array<i64: 16, 8>}]} {
    %c0 = arith.constant 0 : index
    %c0_0 = arith.constant 0 : index
    %0 = vector.load %arg1[%c0, %c0_0] : memref<16x16xf32, #tpu.memory_space<vmem>>, vector<16x16xf32>
    %c0_1 = arith.constant 0 : index
    %c0_2 = arith.constant 0 : index
    %1 = vector.load %arg2[%c0_1, %c0_2] : memref<16x32xf32, #tpu.memory_space<vmem>>, vector<16x32xf32>
    %cst = arith.constant dense<0.000000e+00> : vector<16x32xf32>
    %2 = tpu.matmul %0, %1, %cst {dimension_numbers = #tpu.dot_dimension_numbers<[1], [0], [0], [1], [0, 0, 1, 1], [], []>} : vector<16x16xf32>, vector<16x32xf32>, vector<16x32xf32> -> vector<16x32xf32>
    %c0_3 = arith.constant 0 : index
    %c0_4 = arith.constant 0 : index
    %3 = vector.load %arg3[%c0_3, %c0_4] : memref<1x32xf32, #tpu.memory_space<vmem>>, vector<1x32xf32>
    %4 = vector.broadcast %3 : vector<1x32xf32> to vector<16x32xf32>
    %5 = arith.addf %2, %4 : vector<16x32xf32>
    %cst_5 = arith.constant 0.000000e+00 : f32
    %6 = vector.broadcast %cst_5 : f32 to vector<16x32xf32>
    %7 = arith.maximumf %5, %6 : vector<16x32xf32>
    %c0_6 = arith.constant 0 : index
    %c0_7 = arith.constant 0 : index
    %8 = vector.load %arg4[%c0_6, %c0_7] : memref<32x32xf32, #tpu.memory_space<vmem>>, vector<32x32xf32>
    %cst_8 = arith.constant dense<0.000000e+00> : vector<16x32xf32>
    %9 = tpu.matmul %7, %8, %cst_8 {dimension_numbers = #tpu.dot_dimension_numbers<[1], [0], [0], [1], [0, 0, 1, 1], [], []>} : vector<16x32xf32>, vector<32x32xf32>, vector<16x32xf32> -> vector<16x32xf32>
    %c0_9 = arith.constant 0 : index
    %c0_10 = arith.constant 0 : index
    %10 = vector.load %arg5[%c0_9, %c0_10] : memref<1x32xf32, #tpu.memory_space<vmem>>, vector<1x32xf32>
    %11 = vector.broadcast %10 : vector<1x32xf32> to vector<16x32xf32>
    %12 = arith.addf %9, %11 : vector<16x32xf32>
    %cst_11 = arith.constant 0.000000e+00 : f32
    %13 = vector.broadcast %cst_11 : f32 to vector<16x32xf32>
    %14 = arith.maximumf %12, %13 : vector<16x32xf32>
    %c0_12 = arith.constant 0 : index
    %c0_13 = arith.constant 0 : index
    %c0_14 = arith.constant 0 : index
    %15 = vector.load %arg6[%c0_12, %c0_13, %c0_14] : memref<1x32x32xf32, #tpu.memory_space<vmem>>, vector<1x32x32xf32>
    %16 = vector.shape_cast %15 : vector<1x32x32xf32> to vector<32x32xf32>
    %cst_15 = arith.constant dense<0.000000e+00> : vector<16x32xf32>
    %17 = tpu.matmul %14, %16, %cst_15 {dimension_numbers = #tpu.dot_dimension_numbers<[1], [0], [0], [1], [0, 0, 1, 1], [], []>} : vector<16x32xf32>, vector<32x32xf32>, vector<16x32xf32> -> vector<16x32xf32>
    %c0_16 = arith.constant 0 : index
    %c0_17 = arith.constant 0 : index
    %c0_18 = arith.constant 0 : index
    %18 = vector.load %arg7[%c0_16, %c0_17, %c0_18] : memref<1x1x32xf32, #tpu.memory_space<vmem>>, vector<1x1x32xf32>
    %19 = vector.shape_cast %18 : vector<1x1x32xf32> to vector<1x32xf32>
    %20 = vector.broadcast %19 : vector<1x32xf32> to vector<16x32xf32>
    %21 = arith.addf %17, %20 : vector<16x32xf32>
    %cst_19 = arith.constant 0.000000e+00 : f32
    %22 = vector.broadcast %cst_19 : f32 to vector<16x32xf32>
    %23 = arith.maximumf %21, %22 : vector<16x32xf32>
    %c0_20 = arith.constant 0 : index
    %c0_21 = arith.constant 0 : index
    %24 = vector.load %arg8[%c0_20, %c0_21] : memref<32x8xf32, #tpu.memory_space<vmem>>, vector<32x8xf32>
    %cst_22 = arith.constant dense<0.000000e+00> : vector<16x8xf32>
    %25 = tpu.matmul %23, %24, %cst_22 {dimension_numbers = #tpu.dot_dimension_numbers<[1], [0], [0], [1], [0, 0, 1, 1], [], []>} : vector<16x32xf32>, vector<32x8xf32>, vector<16x8xf32> -> vector<16x8xf32>
    %c0_23 = arith.constant 0 : index
    %c0_24 = arith.constant 0 : index
    %26 = vector.load %arg9[%c0_23, %c0_24] : memref<1x8xf32, #tpu.memory_space<vmem>>, vector<1x8xf32>
    %27 = vector.broadcast %26 : vector<1x8xf32> to vector<16x8xf32>
    %28 = arith.addf %25, %27 : vector<16x8xf32>
    %c0_25 = arith.constant 0 : index
    %c0_26 = arith.constant 0 : index
    %29 = vector.load %arg10[%c0_25, %c0_26] : memref<16x8xf32, #tpu.memory_space<vmem>>, vector<16x8xf32>
    tpu.vector_store %arg10[%c0_25, %c0_26], %28 {strides = array<i32>} : memref<16x8xf32, #tpu.memory_space<vmem>>, vector<16x8xf32>,
    return
  }
  func.func @transform_0(%arg0: i32) -> (i32, i32) {
    %c0_i32 = arith.constant 0 : i32
    %c0_i32_0 = arith.constant 0 : i32
    return %arg0, %c0_i32 : i32, i32
  }
  func.func @transform_1(%arg0: i32) -> (i32, i32) {
    %c0_i32 = arith.constant 0 : i32
    %c0_i32_0 = arith.constant 0 : i32
    %c0_i32_1 = arith.constant 0 : i32
    return %c0_i32, %c0_i32_0 : i32, i32
  }
  func.func @transform_2(%arg0: i32) -> (i32, i32) {
    %c0_i32 = arith.constant 0 : i32
    %c0_i32_0 = arith.constant 0 : i32
    %c0_i32_1 = arith.constant 0 : i32
    return %c0_i32, %c0_i32_0 : i32, i32
  }
  func.func @transform_3(%arg0: i32) -> (i32, i32) {
    %c0_i32 = arith.constant 0 : i32
    %c0_i32_0 = arith.constant 0 : i32
    %c0_i32_1 = arith.constant 0 : i32
    return %c0_i32, %c0_i32_0 : i32, i32
  }
  func.func @transform_4(%arg0: i32) -> (i32, i32) {
    %c0_i32 = arith.constant 0 : i32
    %c0_i32_0 = arith.constant 0 : i32
    %c0_i32_1 = arith.constant 0 : i32
    return %c0_i32, %c0_i32_0 : i32, i32
  }
  func.func @transform_5(%arg0: i32) -> (i32, i32, i32) {
    %c0_i32 = arith.constant 0 : i32
    %c0_i32_0 = arith.constant 0 : i32
    %c0_i32_1 = arith.constant 0 : i32
    %c0_i32_2 = arith.constant 0 : i32
    return %c0_i32, %c0_i32_0, %c0_i32_1 : i32, i32, i32
  }
  func.func @transform_6(%arg0: i32) -> (i32, i32, i32) {
    %c0_i32 = arith.constant 0 : i32
    %c0_i32_0 = arith.constant 0 : i32
    %c0_i32_1 = arith.constant 0 : i32
    %c0_i32_2 = arith.constant 0 : i32
    return %c0_i32, %c0_i32_0, %c0_i32_1 : i32, i32, i32
  }
  func.func @transform_7(%arg0: i32) -> (i32, i32) {
    %c0_i32 = arith.constant 0 : i32
    %c0_i32_0 = arith.constant 0 : i32
    %c0_i32_1 = arith.constant 0 : i32
    return %c0_i32, %c0_i32_0 : i32, i32
  }
  func.func @transform_8(%arg0: i32) -> (i32, i32) {
    %c0_i32 = arith.constant 0 : i32
    %c0_i32_0 = arith.constant 0 : i32
    %c0_i32_1 = arith.constant 0 : i32
    return %c0_i32, %c0_i32_0 : i32, i32
  }
  func.func @transform_9(%arg0: i32) -> (i32, i32) {
    %c0_i32 = arith.constant 0 : i32
    %c0_i32_0 = arith.constant 0 : i32
    return %arg0, %c0_i32 : i32, i32
  }
}

</mosaic_0001>

<llo_original>
// kernel: tpu_custom_call.1
$region0: #{tpu_custom_call.1}
  #allocation0 [shape = 'u32[]', space=smem, size = 0x4, offset = 0x4, fixed_abs, tag = 'smem constant byte address 0x4 - core index']
  #allocation1 [shape = 'u32[144,128]{1,0:T(1,128)}', space=vmem, size = 0x12000, scoped, tag = 'internal scratch']
  %s0 = inlined_call_operand.hbm [shape: f32[16,16], index: 0, kind: input, shape index: {}]
  %s1 = inlined_call_operand.hbm [shape: f32[16,32], index: 1, kind: input, shape index: {}]
  %s2 = inlined_call_operand.vmem [shape: f32[1,32], index: 2, kind: input, shape index: {}]
  %s3 = inlined_call_operand.vmem [shape: f32[32,32], index: 3, kind: input, shape index: {}]
  %s4 = inlined_call_operand.vmem [shape: f32[1,32], index: 4, kind: input, shape index: {}]
  %s5 = inlined_call_operand.hbm [shape: f32[1,32,32], index: 5, kind: input, shape index: {}]
  %s6 = inlined_call_operand.vmem [shape: f32[1,1,32], index: 6, kind: input, shape index: {}]
  %s7 = inlined_call_operand.vmem [shape: f32[32,8], index: 7, kind: input, shape index: {}]
  %s8 = inlined_call_operand.vmem [shape: f32[1,8], index: 8, kind: input, shape index: {}]
  %s9 = inlined_call_operand.vmem [shape: f32[16,8], index: 9, kind: output, shape index: {}]
  %s10 = sld [smem:[#allocation0]]
  $region58: #{tpu_custom_call.1} parent=0
    _
  %s12 = ssub.s32 1, %s10
  %s13 = scalar_select 0, %s12, %s10
  $region1: #{tpu_custom_call.1} parent=0
    #allocation2 [shape = 'u8[8192]{0}', space=vmem, size = 0x2000, scoped, tag = 'input window, operand 0, single buffered']
    #allocation3 [shape = 's32[1]{0}', space=sflag, size = 0x4, scoped, tag = 'scoped memory for tpu_custom_call.1']
    #allocation4 [shape = 'u8[8192]{0}', space=vmem, size = 0x2000, scoped, tag = 'input window, operand 1, single buffered']
    #allocation5 [shape = 's32[1]{0}', space=sflag, size = 0x4, scoped, tag = 'scoped memory for tpu_custom_call.1']
    #allocation6 [shape = 'u8[16384]{0}', space=vmem, size = 0x4000, scoped, tag = 'input window, operand 5, single buffered']
    %14 = vsyncpa [#allocation3], 0
    %15 = vsyncpa [#allocation5], 0
    // Predicated region
    $region2: #{tpu_custom_call.1} parent=1 // pred_check
      _
    $region3: #{tpu_custom_call.1} parent=1 // pred_check_branch
      %17 = sbr.rel (0) target = $region5
    $region4: #{tpu_custom_call.1} parent=1 // pred_region
      %s19 = ssub.s32 256, 256
      %20 = vsyncadd [#allocation3], %s19
      %s21 = sshll.u32 [#allocation2], 4
      %s22 = int_to_ptr.vmem [resolvable:$true] %s21
      %27 = dma.hbm_to_vmem [thread:$0]  %s0, 256, %s22, [#allocation3], 128, 128, 8
    $region5: #{tpu_custom_call.1} parent=1 // pred_fallthru
      _
    // Predicated region
    $region6: #{tpu_custom_call.1} parent=1 // pred_check
      _
    $region7: #{tpu_custom_call.1} parent=1 // pred_check_branch
      %29 = sbr.rel (0) target = $region9
    $region8: #{tpu_custom_call.1} parent=1 // pred_region
      %s31 = ssub.s32 256, 256
      %32 = vsyncadd [#allocation5], %s31
      %s33 = sshll.u32 [#allocation4], 4
      %s34 = int_to_ptr.vmem [resolvable:$true] %s33
      %39 = dma.hbm_to_vmem [thread:$0]  %s1, 256, %s34, [#allocation5], 128, 128, 8
    $region9: #{tpu_custom_call.1} parent=1 // pred_fallthru
      _
    // Predicated region
    $region10: #{tpu_custom_call.1} parent=1 // pred_check
      _
    $region11: #{tpu_custom_call.1} parent=1 // pred_check_branch
      %41 = sbr.rel (0) target = $region13
    $region12: #{tpu_custom_call.1} parent=1 // pred_region
      _
    $region13: #{tpu_custom_call.1} parent=1 // pred_fallthru
      _
    // Predicated region
    $region14: #{tpu_custom_call.1} parent=1 // pred_check
      _
    $region15: #{tpu_custom_call.1} parent=1 // pred_check_branch
      %43 = sbr.rel (0) target = $region17
    $region16: #{tpu_custom_call.1} parent=1 // pred_region
      _
    $region17: #{tpu_custom_call.1} parent=1 // pred_fallthru
      _
    // Predicated region
    $region18: #{tpu_custom_call.1} parent=1 // pred_check
      _
    $region19: #{tpu_custom_call.1} parent=1 // pred_check_branch
      %45 = sbr.rel (0) target = $region21
    $region20: #{tpu_custom_call.1} parent=1 // pred_region
      _
    $region21: #{tpu_custom_call.1} parent=1 // pred_fallthru
      _
    // Predicated region
    $region22: #{tpu_custom_call.1} parent=1 // pred_check
      _
    $region23: #{tpu_custom_call.1} parent=1 // pred_check_branch
      %47 = sbr.rel (0) target = $region25
    $region24: #{tpu_custom_call.1} parent=1 // pred_region
      %s49 = ssub.s32 512, 512
      %50 = vsyncadd [#allocation5], %s49
      %s51 = sshll.u32 [#allocation6], 4
      %s52 = int_to_ptr.vmem [resolvable:$true] %s51
      %57 = dma.hbm_to_vmem [thread:$0]  %s5, 512, %s52, [#allocation5], 128, 128, 8
    $region25: #{tpu_custom_call.1} parent=1 // pred_fallthru
      _
    // Predicated region
    $region26: #{tpu_custom_call.1} parent=1 // pred_check
      _
    $region27: #{tpu_custom_call.1} parent=1 // pred_check_branch
      %59 = sbr.rel (0) target = $region29
    $region28: #{tpu_custom_call.1} parent=1 // pred_region
      _
    $region29: #{tpu_custom_call.1} parent=1 // pred_fallthru
      _
    // Predicated region
    $region30: #{tpu_custom_call.1} parent=1 // pred_check
      _
    $region31: #{tpu_custom_call.1} parent=1 // pred_check_branch
      %61 = sbr.rel (0) target = $region33
    $region32: #{tpu_custom_call.1} parent=1 // pred_region
      _
    $region33: #{tpu_custom_call.1} parent=1 // pred_fallthru
      _
    // Predicated region
    $region34: #{tpu_custom_call.1} parent=1 // pred_check
      _
    $region35: #{tpu_custom_call.1} parent=1 // pred_check_branch
      %63 = sbr.rel (0) target = $region37
    $region36: #{tpu_custom_call.1} parent=1 // pred_region
      _
    $region37: #{tpu_custom_call.1} parent=1 // pred_fallthru
      _
    // Predicated region
    $region38: #{tpu_custom_call.1} parent=1 // pred_check
      _
    $region39: #{tpu_custom_call.1} parent=1 // pred_check_branch
      %65 = sbr.rel (0) target = $region41
    $region40: #{tpu_custom_call.1} parent=1 // pred_region
      %66 = dma.done [#allocation3], 256
    $region41: #{tpu_custom_call.1} parent=1 // pred_fallthru
      _
    // Predicated region
    $region42: #{tpu_custom_call.1} parent=1 // pred_check
      _
    $region43: #{tpu_custom_call.1} parent=1 // pred_check_branch
      %68 = sbr.rel (0) target = $region45
    $region44: #{tpu_custom_call.1} parent=1 // pred_region
      %69 = dma.done [#allocation5], 256
    $region45: #{tpu_custom_call.1} parent=1 // pred_fallthru
      _
    // Predicated region
    $region46: #{tpu_custom_call.1} parent=1 // pred_check
      _
    $region47: #{tpu_custom_call.1} parent=1 // pred_check_branch
      %71 = sbr.rel (0) target = $region49
    $region48: #{tpu_custom_call.1} parent=1 // pred_region
      %72 = dma.done [#allocation5], 512
    $region49: #{tpu_custom_call.1} parent=1 // pred_fallthru
      _
    %v73 = vld [vmem:[#allocation2] sm:$0xff]
    %v74 = vld [vmem:[#allocation2 + $0x8] sm:$0xff]
    %v75 = vld [vmem:[#allocation4] sm:$0xff]
    %v76 = vld [vmem:[#allocation4 + $0x8] sm:$0xff]
    %v77 = vld [vmem:[%s2] sm:$0x1]
    %v79 = vlaneseq
    %v80 = vshrl.u32 %v79, 7
    %v81 = vsub.s32 0, %v80
    %v82 = vrot.slane %v77, %v81
    %vm84 = vcmask 130048
    %v86 = vsel %vm84, %v73, 0
    %v89 = vsel %vm84, %v74, 0
    %91 = vmatprep.subr.mxu0 0.0
    %92 = vmatpush1.msra.mxu0 0.0
    %93 = vmatprep.subr.mxu0 0.0
    %94 = vmatpush1.msra.mxu0 0.0
    %95 = vmatprep.subr.mxu0 0.0
    %96 = vmatpush1.msra.mxu0 0.0
    %97 = vmatprep.subr.mxu0 0.0
    %98 = vmatpush1.msra.mxu0 0.0
    %99 = vmatprep.subr.mxu0 0.0
    %100 = vmatpush1.msra.mxu0 0.0
    %101 = vmatprep.subr.mxu0 0.0
    %102 = vmatpush1.msra.mxu0 0.0
    %103 = vmatprep.subr.mxu0 0.0
    %104 = vmatpush1.msra.mxu0 0.0
    %105 = vmatprep.subr.mxu0 0.0
    %106 = vmatpush1.msra.mxu0 0.0
    %107 = vmatprep.subr.mxu0 0.0
    %108 = vmatpush1.msra.mxu0 0.0
    %109 = vmatprep.subr.mxu0 0.0
    %110 = vmatpush1.msra.mxu0 0.0
    %111 = vmatprep.subr.mxu0 0.0
    %112 = vmatpush1.msra.mxu0 0.0
    %113 = vmatprep.subr.mxu0 0.0
    %114 = vmatpush1.msra.mxu0 0.0
    %115 = vmatprep.subr.mxu0 0.0
    %116 = vmatpush1.msra.mxu0 0.0
    %117 = vmatprep.subr.mxu0 0.0
    %118 = vmatpush1.msra.mxu0 0.0
    %119 = vmatprep.subr.mxu0 0.0
    %120 = vmatpush1.msra.mxu0 %v76
    %121 = vmatprep.subr.mxu0 0.0
    %122 = vmatpush1.msra.mxu0 %v75
    %123 = vmatprep.subr.mxu0 0.0
    %124 = vmatpush2.msra.mxu0 0.0
    %125 = vmatprep.subr.mxu0 0.0
    %126 = vmatpush2.msra.mxu0 0.0
    %127 = vmatprep.subr.mxu0 0.0
    %128 = vmatpush2.msra.mxu0 0.0
    %129 = vmatprep.subr.mxu0 0.0
    %130 = vmatpush2.msra.mxu0 0.0
    %131 = vmatprep.subr.mxu0 0.0
    %132 = vmatpush2.msra.mxu0 0.0
    %133 = vmatprep.subr.mxu0 0.0
    %134 = vmatpush2.msra.mxu0 0.0
    %135 = vmatprep.subr.mxu0 0.0
    %136 = vmatpush2.msra.mxu0 0.0
    %137 = vmatprep.subr.mxu0 0.0
    %138 = vmatpush2.msra.mxu0 0.0
    %139 = vmatprep.subr.mxu0 0.0
    %140 = vmatpush2.msra.mxu0 0.0
    %141 = vmatprep.subr.mxu0 0.0
    %142 = vmatpush2.msra.mxu0 0.0
    %143 = vmatprep.subr.mxu0 0.0
    %144 = vmatpush2.msra.mxu0 0.0
    %145 = vmatprep.subr.mxu0 0.0
    %146 = vmatpush2.msra.mxu0 0.0
    %147 = vmatprep.subr.mxu0 0.0
    %148 = vmatpush2.msra.mxu0 0.0
    %149 = vmatprep.subr.mxu0 0.0
    %150 = vmatpush2.msra.mxu0 0.0
    %151 = vmatprep.subr.mxu0 0.0
    %152 = vmatpush2.msra.mxu0 0.0
    %153 = vmatprep.subr.mxu0 0.0
    %154 = vmatpush2.msra.mxu0 0.0
    %155 = vmatprep.mubr.f32.mxu0 0.0
    %156 = vmatmul.mubr.f32.gmra.mxu0 %v86
    %v157 = vpop.f32.mrf.mxu0
    %v158 = vadd.f32 %v82, %v157
    %v159 = vpop.f32.mrf.mxu0
    %160 = vmatprep.mubr.f32.mxu0 0.0
    %161 = vmatmul.mubr.f32.gmra.mxu0 %v89
    %v162 = vpop.f32.mrf.mxu0
    %v163 = vadd.f32 %v82, %v162
    %v164 = vpop.f32.mrf.mxu0
    %165 = vdwg.mxu0
    %v166 = vmax.f32 %v158, 0.0
    %v167 = vmax.f32 %v163, 0.0
    %v168 = vld [vmem:[%s3] sm:$0xff]
    %v169 = vld [vmem:[%s3 + $0x8] sm:$0xff]
    %v170 = vld [vmem:[%s3 + $0x10] sm:$0xff]
    %v171 = vld [vmem:[%s3 + $0x18] sm:$0xff]
    %v172 = vld [vmem:[%s4] sm:$0x1]
    %v174 = vlaneseq
    %v175 = vshrl.u32 %v174, 7
    %v176 = vsub.s32 0, %v175
    %v177 = vrot.slane %v172, %v176
    %vm179 = vcmask 261120
    %v181 = vsel %vm179, %v166, 0
    %v184 = vsel %vm179, %v167, 0
    %186 = vmatprep.subr.mxu0 0.0
    %187 = vmatpush1.msra.mxu0 0.0
    %188 = vmatprep.subr.mxu0 0.0
    %189 = vmatpush1.msra.mxu0 0.0
    %190 = vmatprep.subr.mxu0 0.0
    %191 = vmatpush1.msra.mxu0 0.0
    %192 = vmatprep.subr.mxu0 0.0
    %193 = vmatpush1.msra.mxu0 0.0
    %194 = vmatprep.subr.mxu0 0.0
    %195 = vmatpush1.msra.mxu0 0.0
    %196 = vmatprep.subr.mxu0 0.0
    %197 = vmatpush1.msra.mxu0 0.0
    %198 = vmatprep.subr.mxu0 0.0
    %199 = vmatpush1.msra.mxu0 0.0
    %200 = vmatprep.subr.mxu0 0.0
    %201 = vmatpush1.msra.mxu0 0.0
    %202 = vmatprep.subr.mxu0 0.0
    %203 = vmatpush1.msra.mxu0 0.0
    %204 = vmatprep.subr.mxu0 0.0
    %205 = vmatpush1.msra.mxu0 0.0
    %206 = vmatprep.subr.mxu0 0.0
    %207 = vmatpush1.msra.mxu0 0.0
    %208 = vmatprep.subr.mxu0 0.0
    %209 = vmatpush1.msra.mxu0 0.0
    %210 = vmatprep.subr.mxu0 0.0
    %211 = vmatpush1.msra.mxu0 %v171
    %212 = vmatprep.subr.mxu0 0.0
    %213 = vmatpush1.msra.mxu0 %v170
    %214 = vmatprep.subr.mxu0 0.0
    %215 = vmatpush1.msra.mxu0 %v169
    %216 = vmatprep.subr.mxu0 0.0
    %217 = vmatpush1.msra.mxu0 %v168
    %218 = vmatprep.subr.mxu0 0.0
    %219 = vmatpush2.msra.mxu0 0.0
    %220 = vmatprep.subr.mxu0 0.0
    %221 = vmatpush2.msra.mxu0 0.0
    %222 = vmatprep.subr.mxu0 0.0
    %223 = vmatpush2.msra.mxu0 0.0
    %224 = vmatprep.subr.mxu0 0.0
    %225 = vmatpush2.msra.mxu0 0.0
    %226 = vmatprep.subr.mxu0 0.0
    %227 = vmatpush2.msra.mxu0 0.0
    %228 = vmatprep.subr.mxu0 0.0
    %229 = vmatpush2.msra.mxu0 0.0
    %230 = vmatprep.subr.mxu0 0.0
    %231 = vmatpush2.msra.mxu0 0.0
    %232 = vmatprep.subr.mxu0 0.0
    %233 = vmatpush2.msra.mxu0 0.0
    %234 = vmatprep.subr.mxu0 0.0
    %235 = vmatpush2.msra.mxu0 0.0
    %236 = vmatprep.subr.mxu0 0.0
    %237 = vmatpush2.msra.mxu0 0.0
    %238 = vmatprep.subr.mxu0 0.0
    %239 = vmatpush2.msra.mxu0 0.0
    %240 = vmatprep.subr.mxu0 0.0
    %241 = vmatpush2.msra.mxu0 0.0
    %242 = vmatprep.subr.mxu0 0.0
    %243 = vmatpush2.msra.mxu0 0.0
    %244 = vmatprep.subr.mxu0 0.0
    %245 = vmatpush2.msra.mxu0 0.0
    %246 = vmatprep.subr.mxu0 0.0
    %247 = vmatpush2.msra.mxu0 0.0
    %248 = vmatprep.subr.mxu0 0.0
    %249 = vmatpush2.msra.mxu0 0.0
    %250 = vmatprep.mubr.f32.mxu0 0.0
    %251 = vmatmul.mubr.f32.gmra.mxu0 %v181
    %v252 = vpop.f32.mrf.mxu0
    %v253 = vadd.f32 %v177, %v252
    %v254 = vpop.f32.mrf.mxu0
    %255 = vmatprep.mubr.f32.mxu0 0.0
    %256 = vmatmul.mubr.f32.gmra.mxu0 %v184
    %v257 = vpop.f32.mrf.mxu0
    %v258 = vadd.f32 %v177, %v257
    %v259 = vpop.f32.mrf.mxu0
    %260 = vdwg.mxu0
    %v261 = vmax.f32 %v253, 0.0
    %v262 = vmax.f32 %v258, 0.0
    %v263 = vld [vmem:[#allocation6] sm:$0xff]
    %v264 = vld [vmem:[#allocation6 + $0x8] sm:$0xff]
    %v265 = vld [vmem:[#allocation6 + $0x10] sm:$0xff]
    %v266 = vld [vmem:[#allocation6 + $0x18] sm:$0xff]
    %v267 = vld [vmem:[%s6] sm:$0x1]
    %v269 = vlaneseq
    %v270 = vshrl.u32 %v269, 7
    %v271 = vsub.s32 0, %v270
    %v272 = vrot.slane %v267, %v271
    %v275 = vsel %vm179, %v261, 0
    %v278 = vsel %vm179, %v262, 0
    %280 = vmatprep.subr.mxu0 0.0
    %281 = vmatpush1.msra.mxu0 0.0
    %282 = vmatprep.subr.mxu0 0.0
    %283 = vmatpush1.msra.mxu0 0.0
    %284 = vmatprep.subr.mxu0 0.0
    %285 = vmatpush1.msra.mxu0 0.0
    %286 = vmatprep.subr.mxu0 0.0
    %287 = vmatpush1.msra.mxu0 0.0
    %288 = vmatprep.subr.mxu0 0.0
    %289 = vmatpush1.msra.mxu0 0.0
    %290 = vmatprep.subr.mxu0 0.0
    %291 = vmatpush1.msra.mxu0 0.0
    %292 = vmatprep.subr.mxu0 0.0
    %293 = vmatpush1.msra.mxu0 0.0
    %294 = vmatprep.subr.mxu0 0.0
    %295 = vmatpush1.msra.mxu0 0.0
    %296 = vmatprep.subr.mxu0 0.0
    %297 = vmatpush1.msra.mxu0 0.0
    %298 = vmatprep.subr.mxu0 0.0
    %299 = vmatpush1.msra.mxu0 0.0
    %300 = vmatprep.subr.mxu0 0.0
    %301 = vmatpush1.msra.mxu0 0.0
    %302 = vmatprep.subr.mxu0 0.0
    %303 = vmatpush1.msra.mxu0 0.0
    %304 = vmatprep.subr.mxu0 0.0
    %305 = vmatpush1.msra.mxu0 %v266
    %306 = vmatprep.subr.mxu0 0.0
    %307 = vmatpush1.msra.mxu0 %v265
    %308 = vmatprep.subr.mxu0 0.0
    %309 = vmatpush1.msra.mxu0 %v264
    %310 = vmatprep.subr.mxu0 0.0
    %311 = vmatpush1.msra.mxu0 %v263
    %312 = vmatprep.subr.mxu0 0.0
    %313 = vmatpush2.msra.mxu0 0.0
    %314 = vmatprep.subr.mxu0 0.0
    %315 = vmatpush2.msra.mxu0 0.0
    %316 = vmatprep.subr.mxu0 0.0
    %317 = vmatpush2.msra.mxu0 0.0
    %318 = vmatprep.subr.mxu0 0.0
    %319 = vmatpush2.msra.mxu0 0.0
    %320 = vmatprep.subr.mxu0 0.0
    %321 = vmatpush2.msra.mxu0 0.0
    %322 = vmatprep.subr.mxu0 0.0
    %323 = vmatpush2.msra.mxu0 0.0
    %324 = vmatprep.subr.mxu0 0.0
    %325 = vmatpush2.msra.mxu0 0.0
    %326 = vmatprep.subr.mxu0 0.0
    %327 = vmatpush2.msra.mxu0 0.0
    %328 = vmatprep.subr.mxu0 0.0
    %329 = vmatpush2.msra.mxu0 0.0
    %330 = vmatprep.subr.mxu0 0.0
    %331 = vmatpush2.msra.mxu0 0.0
    %332 = vmatprep.subr.mxu0 0.0
    %333 = vmatpush2.msra.mxu0 0.0
    %334 = vmatprep.subr.mxu0 0.0
    %335 = vmatpush2.msra.mxu0 0.0
    %336 = vmatprep.subr.mxu0 0.0
    %337 = vmatpush2.msra.mxu0 0.0
    %338 = vmatprep.subr.mxu0 0.0
    %339 = vmatpush2.msra.mxu0 0.0
    %340 = vmatprep.subr.mxu0 0.0
    %341 = vmatpush2.msra.mxu0 0.0
    %342 = vmatprep.subr.mxu0 0.0
    %343 = vmatpush2.msra.mxu0 0.0
    %344 = vmatprep.mubr.f32.mxu0 0.0
    %345 = vmatmul.mubr.f32.gmra.mxu0 %v275
    %v346 = vpop.f32.mrf.mxu0
    %v347 = vadd.f32 %v272, %v346
    %v348 = vpop.f32.mrf.mxu0
    %349 = vmatprep.mubr.f32.mxu0 0.0
    %350 = vmatmul.mubr.f32.gmra.mxu0 %v278
    %v351 = vpop.f32.mrf.mxu0
    %v352 = vadd.f32 %v272, %v351
    %v353 = vpop.f32.mrf.mxu0
    %354 = vdwg.mxu0
    %v355 = vmax.f32 %v347, 0.0
    %v356 = vmax.f32 %v352, 0.0
    %v357 = vld [vmem:[%s7] sm:$0xff]
    %v358 = vld [vmem:[%s7 + $0x8] sm:$0xff]
    %v359 = vld [vmem:[%s7 + $0x10] sm:$0xff]
    %v360 = vld [vmem:[%s7 + $0x18] sm:$0xff]
    %v361 = vld [vmem:[%s8] sm:$0x1]
    %v363 = vlaneseq
    %v364 = vshrl.u32 %v363, 7
    %v365 = vsub.s32 0, %v364
    %v366 = vrot.slane %v361, %v365
    %v369 = vsel %vm179, %v355, 0
    %v372 = vsel %vm179, %v356, 0
    %374 = vmatprep.subr.mxu0 0.0
    %375 = vmatpush1.msra.mxu0 0.0
    %376 = vmatprep.subr.mxu0 0.0
    %377 = vmatpush1.msra.mxu0 0.0
    %378 = vmatprep.subr.mxu0 0.0
    %379 = vmatpush1.msra.mxu0 0.0
    %380 = vmatprep.subr.mxu0 0.0
    %381 = vmatpush1.msra.mxu0 0.0
    %382 = vmatprep.subr.mxu0 0.0
    %383 = vmatpush1.msra.mxu0 0.0
    %384 = vmatprep.subr.mxu0 0.0
    %385 = vmatpush1.msra.mxu0 0.0
    %386 = vmatprep.subr.mxu0 0.0
    %387 = vmatpush1.msra.mxu0 0.0
    %388 = vmatprep.subr.mxu0 0.0
    %389 = vmatpush1.msra.mxu0 0.0
    %390 = vmatprep.subr.mxu0 0.0
    %391 = vmatpush1.msra.mxu0 0.0
    %392 = vmatprep.subr.mxu0 0.0
    %393 = vmatpush1.msra.mxu0 0.0
    %394 = vmatprep.subr.mxu0 0.0
    %395 = vmatpush1.msra.mxu0 0.0
    %396 = vmatprep.subr.mxu0 0.0
    %397 = vmatpush1.msra.mxu0 0.0
    %398 = vmatprep.subr.mxu0 0.0
    %399 = vmatpush1.msra.mxu0 %v360
    %400 = vmatprep.subr.mxu0 0.0
    %401 = vmatpush1.msra.mxu0 %v359
    %402 = vmatprep.subr.mxu0 0.0
    %403 = vmatpush1.msra.mxu0 %v358
    %404 = vmatprep.subr.mxu0 0.0
    %405 = vmatpush1.msra.mxu0 %v357
    %406 = vmatprep.subr.mxu0 0.0
    %407 = vmatpush2.msra.mxu0 0.0
    %408 = vmatprep.subr.mxu0 0.0
    %409 = vmatpush2.msra.mxu0 0.0
    %410 = vmatprep.subr.mxu0 0.0
    %411 = vmatpush2.msra.mxu0 0.0
    %412 = vmatprep.subr.mxu0 0.0
    %413 = vmatpush2.msra.mxu0 0.0
    %414 = vmatprep.subr.mxu0 0.0
    %415 = vmatpush2.msra.mxu0 0.0
    %416 = vmatprep.subr.mxu0 0.0
    %417 = vmatpush2.msra.mxu0 0.0
    %418 = vmatprep.subr.mxu0 0.0
    %419 = vmatpush2.msra.mxu0 0.0
    %420 = vmatprep.subr.mxu0 0.0
    %421 = vmatpush2.msra.mxu0 0.0
    %422 = vmatprep.subr.mxu0 0.0
    %423 = vmatpush2.msra.mxu0 0.0
    %424 = vmatprep.subr.mxu0 0.0
    %425 = vmatpush2.msra.mxu0 0.0
    %426 = vmatprep.subr.mxu0 0.0
    %427 = vmatpush2.msra.mxu0 0.0
    %428 = vmatprep.subr.mxu0 0.0
    %429 = vmatpush2.msra.mxu0 0.0
    %430 = vmatprep.subr.mxu0 0.0
    %431 = vmatpush2.msra.mxu0 0.0
    %432 = vmatprep.subr.mxu0 0.0
    %433 = vmatpush2.msra.mxu0 0.0
    %434 = vmatprep.subr.mxu0 0.0
    %435 = vmatpush2.msra.mxu0 0.0
    %436 = vmatprep.subr.mxu0 0.0
    %437 = vmatpush2.msra.mxu0 0.0
    %438 = vmatprep.mubr.f32.mxu0 0.0
    %439 = vmatmul.mubr.f32.gmra.mxu0 %v369
    %v440 = vpop.f32.mrf.mxu0
    %v441 = vadd.f32 %v366, %v440
    %v442 = vpop.f32.mrf.mxu0
    %443 = vmatprep.mubr.f32.mxu0 0.0
    %444 = vmatmul.mubr.f32.gmra.mxu0 %v372
    %v445 = vpop.f32.mrf.mxu0
    %v446 = vadd.f32 %v366, %v445
    %v447 = vpop.f32.mrf.mxu0
    %448 = vdwg.mxu0
    %vm449 = vcmask 64512
    %450 = vst.msk [vmem:[%s9] sm:$0xff] %vm449, %v441
    %451 = vst.msk [vmem:[%s9 + $0x8] sm:$0xff] %vm449, %v446
    // Predicated region
    $region50: #{tpu_custom_call.1} parent=1 // pred_check
      _
    $region51: #{tpu_custom_call.1} parent=1 // pred_check_branch
      %453 = sbr.rel (0) target = $region53
    $region52: #{tpu_custom_call.1} parent=1 // pred_region
      _
    $region53: #{tpu_custom_call.1} parent=1 // pred_fallthru
      _
    // Predicated region
    $region54: #{tpu_custom_call.1} parent=1 // pred_check
      _
    $region55: #{tpu_custom_call.1} parent=1 // pred_check_branch
      %455 = sbr.rel (0) target = $region57
    $region56: #{tpu_custom_call.1} parent=1 // pred_region
      _
    $region57: #{tpu_custom_call.1} parent=1 // pred_fallthru
      _
    %456 = vsyncpa [#allocation3], 1
    %457 = vsyncpa [#allocation5], 1

</llo_original>
